<compile_context>
chip_gen: v7x
topology: tpu7x:2x2x1
jax: 0.10.0
libtpu: 0.0.40
codegen_flags: <defaults>
</compile_context>

<pallas_src>
import functools

import jax
import jax.numpy as jnp
from jax.experimental import pallas as pl
from jax.experimental.pallas import tpu as pltpu

LANE = 128      # vreg lane width
TM_MAX = 2048   # max sublane rows per grid step (1 MiB f32 block)
NCORES = 2      # leading "parallel" grid axis (TensorCores on v7x)
SMOOTH = 1e-4


def _round_up(x, m):
    return ((x + m - 1) // m) * m


def _bce_kernel(yp_ref, yt_ref, out_ref, acc_ref, *,
                inv_n, tiles_per_core, total_tiles, valid_in_tail, ncores):
    c = pl.program_id(0)            # core (parallel) axis
    i = pl.program_id(1)            # reduction axis (this core's tile index)
    t = c * tiles_per_core + i      # global tile index

    @pl.when(i == 0)
    def _():
        acc_ref[...] = jnp.zeros_like(acc_ref)

    yp = yp_ref[...].astype(jnp.float32)
    yt = yt_ref[...].astype(jnp.float32)
    term = yt * jnp.log(yp + SMOOTH) + (1.0 - yt) * jnp.log(1.0 - yp + SMOOTH)

    tm, tn = term.shape
    tile_elems = tm * tn
    tail_is_full = (valid_in_tail == tile_elems)             # static Python bool
    has_phantom = (ncores * tiles_per_core != total_tiles)   # static Python bool

    if tail_is_full and not has_phantom:
        # Fast path: every tile is fully valid -> pure VPU accumulate.
        acc_ref[...] += term
    else:
        @pl.when(t < total_tiles - 1)
        def _():
            acc_ref[...] += term

        @pl.when(t == total_tiles - 1)
        def _():
            if tail_is_full:
                acc_ref[...] += term
            else:
                row = jax.lax.broadcasted_iota(jnp.int32, (tm, tn), 0)
                col = jax.lax.broadcasted_iota(jnp.int32, (tm, tn), 1)
                flat = row * tn + col                         # index within tile
                acc_ref[...] += jnp.where(flat < valid_in_tail, term, 0.0)
        # t > total_tiles - 1: phantom (clamped) tile on the last core -> skip.

    @pl.when(i == tiles_per_core - 1)
    def _():
        partial = -jnp.sum(acc_ref[...]) * inv_n
        out_ref[...] = jnp.broadcast_to(partial, out_ref.shape)


@jax.jit
def b_crossentropy(y_pred, y_true):
    """Pallas TPU implementation of B_crossentropy.forward (returns scalar f32)."""
    n = y_pred.size                     # static Python int at trace time
    yp = jnp.ravel(y_pred)
    yt = jnp.ravel(y_true)

    # Pad (only if needed) up to a whole number of 128-lane rows.  Padded elements
    # are masked in the kernel's final tile; safe pad values keep the logs finite.
    n_pad = _round_up(n, LANE)
    if n_pad != n:
        yp = jnp.pad(yp, (0, n_pad - n), constant_values=SMOOTH)
        yt = jnp.pad(yt, (0, n_pad - n), constant_values=0)
    rows = n_pad // LANE
    yp2 = yp.reshape(rows, LANE)
    yt2 = yt.reshape(rows, LANE)

    # Row-tile size: as large as possible, but no larger than one core's share of
    # the rows for small inputs.  Always a multiple of 8.
    tm = min(TM_MAX, _round_up(pl.cdiv(rows, NCORES), 8))
    total_tiles = pl.cdiv(rows, tm)
    tiles_per_core = pl.cdiv(total_tiles, NCORES)
    tile_elems = tm * LANE
    valid_in_tail = n - (total_tiles - 1) * tile_elems   # valid elems in last tile

    def in_index(c, i):
        # Clamp phantom tiles (last core, when total_tiles % NCORES != 0) onto the
        # last real tile; their contribution is skipped inside the kernel.
        return (jnp.minimum(c * tiles_per_core + i, total_tiles - 1), 0)

    kernel = functools.partial(
        _bce_kernel,
        inv_n=1.0 / n,
        tiles_per_core=tiles_per_core,
        total_tiles=total_tiles,
        valid_in_tail=valid_in_tail,
        ncores=NCORES,
    )

    out = pl.pallas_call(
        kernel,
        out_shape=jax.ShapeDtypeStruct((NCORES, 8, LANE), jnp.float32),
        grid=(NCORES, tiles_per_core),
        in_specs=[
            pl.BlockSpec((tm, LANE), in_index),
            pl.BlockSpec((tm, LANE), in_index),
        ],
        out_specs=pl.BlockSpec((1, 8, LANE), lambda c, i: (c, 0, 0)),
        scratch_shapes=[pltpu.VMEM((tm, LANE), jnp.float32)],
        compiler_params=pltpu.CompilerParams(
            dimension_semantics=("parallel", "arbitrary"),
        ),
    )(yp2, yt2)

    # Each core's block is filled with its (already negated & 1/n-scaled) partial
    # loss; combine the per-core partials.
    return jnp.sum(out[:, 0, 0])


def _reference(y_pred, y_true):
    s = SMOOTH
    term = y_true * jnp.log(y_pred + s) + (1.0 - y_true) * jnp.log(1.0 - y_pred + s)
    return -jnp.mean(term)


if __name__ == "__main__":
    key = jax.random.PRNGKey(0)
    k1, k2, k3, k4 = jax.random.split(key, 4)

    # NCHW-shaped probability map + binary mask, as the loss would see them.
    shape = (2, 4, 16, 16)
    y_pred = jax.random.uniform(k1, shape, dtype=jnp.float32, minval=0.01, maxval=0.99)
    y_true = (jax.random.uniform(k2, shape, dtype=jnp.float32) > 0.5).astype(jnp.float32)

    loss = jax.block_until_ready(b_crossentropy(y_pred, y_true))
    ref = _reference(y_pred, y_true)
    assert jnp.allclose(loss, ref, rtol=1e-5, atol=1e-6), (loss, ref)

    # Ragged element count (not a multiple of 128) to exercise the masked tail tile.
    shape2 = (3, 5, 7, 11)
    y_pred2 = jax.random.uniform(k3, shape2, dtype=jnp.float32, minval=0.01, maxval=0.99)
    y_true2 = (jax.random.uniform(k4, shape2, dtype=jnp.float32) > 0.5).astype(jnp.float32)
    loss2 = jax.block_until_ready(b_crossentropy(y_pred2, y_true2))
    ref2 = _reference(y_pred2, y_true2)
    assert jnp.allclose(loss2, ref2, rtol=1e-5, atol=1e-6), (loss2, ref2)

    print("KERNEL_OK")
</pallas_src>

<mosaic_0001>
module attributes {stable_mosaic.version = 11 : i64} {
  func.func @_bce_kernel(%arg0: i32, %arg1: i32, %arg2: memref<8x128xf32, #tpu.memory_space<vmem>>, %arg3: memref<8x128xf32, #tpu.memory_space<vmem>>, %arg4: memref<1x8x128xf32, #tpu.memory_space<vmem>>, %arg5: memref<8x128xf32, #tpu.memory_space<vmem>>) attributes {dimension_semantics = [#tpu.dimension_semantics<parallel>, #tpu.dimension_semantics<arbitrary>], iteration_bounds = array<i64: 2, 1>, scalar_prefetch = 0 : i64, scratch_operands = 1 : i64, tpu.core_type = #tpu.core_type<tc>, window_params = [{transform_indices = @transform_0, window_bounds = array<i64: 8, 128>}, {transform_indices = @transform_1, window_bounds = array<i64: 8, 128>}, {transform_indices = @transform_2, window_bounds = array<i64: 1, 8, 128>}]} {
    %c0_i32 = arith.constant 0 : i32
    %0 = arith.cmpi eq, %arg1, %c0_i32 : i32
    %1 = arith.extui %0 : i1 to i32
    %c0_i32_0 = arith.constant 0 : i32
    %2 = arith.cmpi ne, %1, %c0_i32_0 : i32
    scf.if %2 {
      %cst_13 = arith.constant 0.000000e+00 : f32
      %24 = vector.broadcast %cst_13 : f32 to vector<8x128xf32>
      %c0_14 = arith.constant 0 : index
      %c0_15 = arith.constant 0 : index
      %25 = vector.load %arg5[%c0_14, %c0_15] : memref<8x128xf32, #tpu.memory_space<vmem>>, vector<8x128xf32>
      tpu.vector_store %arg5[%c0_14, %c0_15], %24 {strides = array<i32>} : memref<8x128xf32, #tpu.memory_space<vmem>>, vector<8x128xf32>,
    } else {
    }
    %c0 = arith.constant 0 : index
    %c0_1 = arith.constant 0 : index
    %3 = vector.load %arg2[%c0, %c0_1] : memref<8x128xf32, #tpu.memory_space<vmem>>, vector<8x128xf32>
    %c0_2 = arith.constant 0 : index
    %c0_3 = arith.constant 0 : index
    %4 = vector.load %arg3[%c0_2, %c0_3] : memref<8x128xf32, #tpu.memory_space<vmem>>, vector<8x128xf32>
    %cst = arith.constant 9.99999974E-5 : f32
    %5 = vector.broadcast %cst : f32 to vector<8x128xf32>
    %6 = arith.addf %3, %5 : vector<8x128xf32>
    %7 = math.log %6 : vector<8x128xf32>
    %8 = arith.mulf %4, %7 : vector<8x128xf32>
    %cst_4 = arith.constant 1.000000e+00 : f32
    %9 = vector.broadcast %cst_4 : f32 to vector<8x128xf32>
    %10 = arith.subf %9, %4 : vector<8x128xf32>
    %cst_5 = arith.constant 1.000000e+00 : f32
    %11 = vector.broadcast %cst_5 : f32 to vector<8x128xf32>
    %12 = arith.subf %11, %3 : vector<8x128xf32>
    %cst_6 = arith.constant 9.99999974E-5 : f32
    %13 = vector.broadcast %cst_6 : f32 to vector<8x128xf32>
    %14 = arith.addf %12, %13 : vector<8x128xf32>
    %15 = math.log %14 : vector<8x128xf32>
    %16 = arith.mulf %10, %15 : vector<8x128xf32>
    %17 = arith.addf %8, %16 : vector<8x128xf32>
    %c0_7 = arith.constant 0 : index
    %c0_8 = arith.constant 0 : index
    %18 = vector.load %arg5[%c0_7, %c0_8] : memref<8x128xf32, #tpu.memory_space<vmem>>, vector<8x128xf32>
    %19 = arith.addf %18, %17 : vector<8x128xf32>
    %c0_9 = arith.constant 0 : index
    %c0_10 = arith.constant 0 : index
    %20 = vector.load %arg5[%c0_9, %c0_10] : memref<8x128xf32, #tpu.memory_space<vmem>>, vector<8x128xf32>
    tpu.vector_store %arg5[%c0_9, %c0_10], %19 {strides = array<i32>} : memref<8x128xf32, #tpu.memory_space<vmem>>, vector<8x128xf32>,
    %c0_i32_11 = arith.constant 0 : i32
    %21 = arith.cmpi eq, %arg1, %c0_i32_11 : i32
    %22 = arith.extui %21 : i1 to i32
    %c0_i32_12 = arith.constant 0 : i32
    %23 = arith.cmpi ne, %22, %c0_i32_12 : i32
    scf.if %23 {
      %c0_13 = arith.constant 0 : index
      %c0_14 = arith.constant 0 : index
      %24 = vector.load %arg5[%c0_13, %c0_14] : memref<8x128xf32, #tpu.memory_space<vmem>>, vector<8x128xf32>
      %25 = vector.shape_cast %24 : vector<8x128xf32> to vector<1x8x128xf32>
      %cst_15 = arith.constant dense<0.000000e+00> : vector<1xf32>
      %26 = vector.multi_reduction <add>, %25, %cst_15 [1, 2] : vector<1x8x128xf32> to vector<1xf32>
      %27 = vector.shape_cast %26 : vector<1xf32> to vector<1x1x1xf32>
      %28 = vector.extract %27[0, 0, 0] : f32 from vector<1x1x1xf32>
      %cst_16 = arith.constant 0.000000e+00 : f32
      %29 = arith.subf %cst_16, %28 : f32
      %cst_17 = arith.constant 4.8828125E-4 : f32
      %30 = arith.mulf %29, %cst_17 : f32
      %31 = vector.broadcast %30 : f32 to vector<1x8x128xf32>
      %c0_18 = arith.constant 0 : index
      %c0_19 = arith.constant 0 : index
      %c0_20 = arith.constant 0 : index
      %32 = vector.load %arg4[%c0_18, %c0_19, %c0_20] : memref<1x8x128xf32, #tpu.memory_space<vmem>>, vector<1x8x128xf32>
      tpu.vector_store %arg4[%c0_18, %c0_19, %c0_20], %31 {strides = array<i32>} : memref<1x8x128xf32, #tpu.memory_space<vmem>>, vector<1x8x128xf32>,
    } else {
    }
    return
  }
  func.func @transform_0(%arg0: i32, %arg1: i32) -> (i32, i32) {
    %c1_i32 = arith.constant 1 : i32
    %0 = arith.muli %arg0, %c1_i32 : i32
    %1 = arith.addi %0, %arg1 : i32
    %c1_i32_0 = arith.constant 1 : i32
    %2 = arith.minsi %1, %c1_i32_0 : i32
    %c0_i32 = arith.constant 0 : i32
    %c0_i32_1 = arith.constant 0 : i32
    return %2, %c0_i32 : i32, i32
  }
  func.func @transform_1(%arg0: i32, %arg1: i32) -> (i32, i32) {
    %c1_i32 = arith.constant 1 : i32
    %0 = arith.muli %arg0, %c1_i32 : i32
    %1 = arith.addi %0, %arg1 : i32
    %c1_i32_0 = arith.constant 1 : i32
    %2 = arith.minsi %1, %c1_i32_0 : i32
    %c0_i32 = arith.constant 0 : i32
    %c0_i32_1 = arith.constant 0 : i32
    return %2, %c0_i32 : i32, i32
  }
  func.func @transform_2(%arg0: i32, %arg1: i32) -> (i32, i32, i32) {
    %c0_i32 = arith.constant 0 : i32
    %c0_i32_0 = arith.constant 0 : i32
    %c0_i32_1 = arith.constant 0 : i32
    return %arg0, %c0_i32, %c0_i32_0 : i32, i32, i32
  }
}

</mosaic_0001>

<llo_original>
// kernel: b_crossentropy.1
$region0: #{b_crossentropy.1}
  #allocation0 [shape = 'u32[]', space=smem, size = 0x4, offset = 0x4, fixed_abs, tag = 'smem constant byte address 0x4 - core index']
  #allocation1 [shape = 'u32[144,128]{1,0:T(1,128)}', space=vmem, size = 0x12000, scoped, tag = 'internal scratch']
  #allocation2 [shape = 'f32[8,128]{1,0:T(8,128)}', space=vmem, size = 0x1000, scoped, tag = 'scratch operand']
  %s0 = inlined_call_operand.vmem [shape: f32[16,128], index: 0, kind: input, shape index: {}]
  %s1 = inlined_call_operand.vmem [shape: f32[16,128], index: 1, kind: input, shape index: {}]
  %s2 = inlined_call_operand.vmem [shape: f32[2,8,128], index: 2, kind: output, shape index: {}]
  %s3 = sld [smem:[#allocation0]]
  $region49: #{b_crossentropy.1} parent=0
    _
  %s5 = ssub.s32 1, %s3
  %s6 = scalar_select 0, %s5, %s3
  loop: start=0, step=1, limit=4
  $region2: #{b_crossentropy.1} parent=0 // loop_pre_header
    _
  $region3: #{b_crossentropy.1} parent=0 // loop_header
    %s8 = sphi 0, %s12
    %p9 = scmp.ge.s32.totalorder %s8, 4
    %s15 = sphi 0, %s27
    %s16 = sphi 0, %s23
    %s17 = sphi 0, %s15
    %s18 = sphi 0, %s16
    %s19 = sphi 0, %s17
    %s20 = sphi 0, %s18
    %s36 = sphi 0, %s38
    %s39 = sphi 0, %s36
    %s40 = sphi 0, %s39
    %s56 = sphi 0, %s40
    %s68 = sphi 0, %s70
    %s71 = sphi 0, %s68
    %s72 = sphi 0, %s71
    %s88 = sphi 0, %s72
    %s94 = sphi 0, %s96
    %s97 = sphi 0, %s94
    %s98 = sphi 0, %s97
    %s114 = sphi 0, %s98
  $region4: #{b_crossentropy.1} parent=0 // loop_header_branch
    %11 = sbr.rel (%p9) target = $region8
  $region5: #{b_crossentropy.1} parent=0 // loop_body
    %s13 = ssub.s32 %s8, 1
    %s14 = ssub.s32 %s8, 2
    %s21 = sadd.s32 1, %s16
    %p22 = scmp.ge.s32.totalorder %s21, 1
    %s23 = scalar_select %p22, 0, %s21
    %s24 = sadd.s32 1, %s15
    %s25 = scalar_select %p22, %s24, %s15
    %p26 = scmp.ge.s32.totalorder %s25, 2
    %s27 = scalar_select %p26, 0, %s25
    %s28 = sadd.s32 %s15, %s16
    %p29 = scmp.lt.s32.totalorder %s28, 1
    %s30 = scalar_select %p29, %s28, 1
    %s31 = sadd.s32 %s27, %s23
    %p32 = scmp.lt.s32.totalorder %s31, 1
    %s33 = scalar_select %p32, %s31, 1
    %s34 = ssub.s32 %s30, %s33
    %p35 = scmp.eq.s32.totalorder %s34, 0
    %s37 = sadd.s32 %s36, 1
    %s38 = scalar_select %p35, %s36, %s37
    %p41 = pneg %p35
    %p42 = scmp.eq.s32.totalorder %s8, 1
    %p43 = por %p41, %p42
    %p44 = scmp.ne.s32.totalorder %s36, %s39
    %p45 = scmp.eq.s32.totalorder %s8, 0
    %p46 = por %p44, %p45
    %p47 = scmp.ne.s32.totalorder %s36, %s39
    %p48 = scmp.eq.s32.totalorder %s13, 1
    %p49 = por %p47, %p48
    %p50 = scmp.ne.s32.totalorder %s39, %s40
    %p51 = scmp.eq.s32.totalorder %s13, 0
    %p52 = por %p50, %p51
    %p53 = scmp.ne.s32.totalorder %s39, %s40
    %p54 = scmp.eq.s32.totalorder %s14, 1
    %p55 = por %p53, %p54
    %p57 = scmp.ne.s32.totalorder %s40, %s56
    %p58 = scmp.eq.s32.totalorder %s14, 0
    %p59 = por %p57, %p58
    %s60 = sadd.s32 %s15, %s16
    %p61 = scmp.lt.s32.totalorder %s60, 1
    %s62 = scalar_select %p61, %s60, 1
    %s63 = sadd.s32 %s27, %s23
    %p64 = scmp.lt.s32.totalorder %s63, 1
    %s65 = scalar_select %p64, %s63, 1
    %s66 = ssub.s32 %s62, %s65
    %p67 = scmp.eq.s32.totalorder %s66, 0
    %s69 = sadd.s32 %s68, 1
    %s70 = scalar_select %p67, %s68, %s69
    %p73 = pneg %p67
    %p74 = scmp.eq.s32.totalorder %s8, 1
    %p75 = por %p73, %p74
    %p76 = scmp.ne.s32.totalorder %s68, %s71
    %p77 = scmp.eq.s32.totalorder %s8, 0
    %p78 = por %p76, %p77
    %p79 = scmp.ne.s32.totalorder %s68, %s71
    %p80 = scmp.eq.s32.totalorder %s13, 1
    %p81 = por %p79, %p80
    %p82 = scmp.ne.s32.totalorder %s71, %s72
    %p83 = scmp.eq.s32.totalorder %s13, 0
    %p84 = por %p82, %p83
    %p85 = scmp.ne.s32.totalorder %s71, %s72
    %p86 = scmp.eq.s32.totalorder %s14, 1
    %p87 = por %p85, %p86
    %p89 = scmp.ne.s32.totalorder %s72, %s88
    %p90 = scmp.eq.s32.totalorder %s14, 0
    %p91 = por %p89, %p90
    %s92 = ssub.s32 %s15, %s27
    %p93 = scmp.eq.s32.totalorder %s92, 0
    %s95 = sadd.s32 %s94, 1
    %s96 = scalar_select %p93, %s94, %s95
    %p99 = pneg %p93
    %p100 = scmp.eq.s32.totalorder %s8, 1
    %p101 = por %p99, %p100
    %p102 = scmp.ne.s32.totalorder %s94, %s97
    %p103 = scmp.eq.s32.totalorder %s8, 0
    %p104 = por %p102, %p103
    %p105 = scmp.ne.s32.totalorder %s94, %s97
    %p106 = scmp.eq.s32.totalorder %s13, 1
    %p107 = por %p105, %p106
    %p108 = scmp.ne.s32.totalorder %s97, %s98
    %p109 = scmp.eq.s32.totalorder %s13, 0
    %p110 = por %p108, %p109
    %p111 = scmp.ne.s32.totalorder %s97, %s98
    %p112 = scmp.eq.s32.totalorder %s14, 1
    %p113 = por %p111, %p112
    %p115 = scmp.ne.s32.totalorder %s98, %s114
    %p116 = scmp.eq.s32.totalorder %s14, 0
    %p117 = por %p115, %p116
    %p118 = scmp.le.s32.totalorder 1, %s8
    %p119 = scmp.lt.s32.totalorder %s8, 3
    %p120 = pnand %p118, %p119
    %p121 = pneg %p120
    // Predicated region
    $region9: #{b_crossentropy.1} parent=5 // pred_check
      _
    $region10: #{b_crossentropy.1} parent=5 // pred_check_branch
      %123 = sbr.rel (%p120) target = $region12
    $region11: #{b_crossentropy.1} parent=5 // pred_region
      %s124 = ssub.s32 %s8, 1
    $region12: #{b_crossentropy.1} parent=5 // pred_fallthru
      _
    %p125 = scmp.lt.s32.totalorder %s8, 2
    // Predicated region
    $region13: #{b_crossentropy.1} parent=5 // pred_check
      %p126 = pneg %p125
    $region14: #{b_crossentropy.1} parent=5 // pred_check_branch
      %128 = sbr.rel (%p126) target = $region16
    $region15: #{b_crossentropy.1} parent=5 // pred_region
      // Predicated region
      $region17: #{b_crossentropy.1} parent=15 // pred_check
        %p129 = pneg %p46
      $region18: #{b_crossentropy.1} parent=15 // pred_check_branch
        %131 = sbr.rel (%p129) target = $region20
      $region19: #{b_crossentropy.1} parent=15 // pred_region
        %s132 = sadd.s32 %s15, %s16
        %p133 = scmp.lt.s32.totalorder %s132, 1
        %s134 = scalar_select %p133, %s132, 1
        %p135 = scmp.lt.s32.totalorder %s134, 1
        %s136 = scalar_select %p135, %s134, 1
        %s137 = smul.addr %s136, 8
        %s138 = scalar_lea.vmem %s0, %s137
        %s139 = sadd.s32 %s15, %s16
        %p140 = scmp.lt.s32.totalorder %s139, 1
        %s141 = scalar_select %p140, %s139, 1
      $region20: #{b_crossentropy.1} parent=15 // pred_fallthru
        _
      // Predicated region
      $region21: #{b_crossentropy.1} parent=15 // pred_check
        %p142 = pneg %p78
      $region22: #{b_crossentropy.1} parent=15 // pred_check_branch
        %144 = sbr.rel (%p142) target = $region24
      $region23: #{b_crossentropy.1} parent=15 // pred_region
        %s145 = sadd.s32 %s15, %s16
        %p146 = scmp.lt.s32.totalorder %s145, 1
        %s147 = scalar_select %p146, %s145, 1
        %p148 = scmp.lt.s32.totalorder %s147, 1
        %s149 = scalar_select %p148, %s147, 1
        %s150 = smul.addr %s149, 8
        %s151 = scalar_lea.vmem %s1, %s150
        %s152 = sadd.s32 %s15, %s16
        %p153 = scmp.lt.s32.totalorder %s152, 1
        %s154 = scalar_select %p153, %s152, 1
      $region24: #{b_crossentropy.1} parent=15 // pred_fallthru
        _
    $region16: #{b_crossentropy.1} parent=5 // pred_fallthru
      _
    %p155 = scmp.le.s32.totalorder 1, %s8
    %p156 = scmp.lt.s32.totalorder %s8, 3
    %p157 = pnand %p155, %p156
    %p158 = pneg %p157
    // Predicated region
    $region25: #{b_crossentropy.1} parent=5 // pred_check
      _
    $region26: #{b_crossentropy.1} parent=5 // pred_check_branch
      %160 = sbr.rel (%p157) target = $region28
    $region27: #{b_crossentropy.1} parent=5 // pred_region
      %s161 = ssub.s32 %s8, 1
      %s162 = sadd.s32 %s17, %s18
      %p163 = scmp.lt.s32.totalorder %s162, 1
      %s164 = scalar_select %p163, %s162, 1
      %p165 = scmp.lt.s32.totalorder %s164, 1
      %s166 = scalar_select %p165, %s164, 1
      %s167 = smul.addr %s166, 8
      %s168 = scalar_lea.vmem %s0, %s167
      %p169 = pneg %p52
      %p170 = pneg %p49
      %s171 = sadd.s32 %s17, %s18
      %p172 = scmp.lt.s32.totalorder %s171, 1
      %s173 = scalar_select %p172, %s171, 1
      %p174 = scmp.lt.s32.totalorder %s173, 1
      %s175 = scalar_select %p174, %s173, 1
      %s176 = smul.addr %s175, 8
      %s177 = scalar_lea.vmem %s1, %s176
      %p178 = pneg %p84
      %p179 = pneg %p81
      %p180 = pneg %p110
      %p181 = pneg %p107
      %p182 = scmp.lt.s32.totalorder %s17, 1
      %s183 = scalar_select %p182, %s17, 1
      %s184 = smul.addr %s183, 8
      %s185 = scalar_lea.vmem %s2, %s184
      %s186 = sadd.s32 %s17, %s18
      %p187 = scmp.lt.s32.totalorder %s186, 1
      %s188 = scalar_select %p187, %s186, 1
      %p189 = scmp.lt.s32.totalorder %s188, 1
      %s190 = scalar_select %p189, %s188, 1
      %s191 = smul.addr %s190, 8
      %s192 = scalar_lea.vmem %s0, %s191
      %s193 = sadd.s32 %s17, %s18
      %p194 = scmp.lt.s32.totalorder %s193, 1
      %s195 = scalar_select %p194, %s193, 1
      %s196 = sadd.s32 %s17, %s18
      %p197 = scmp.lt.s32.totalorder %s196, 1
      %s198 = scalar_select %p197, %s196, 1
      %p199 = scmp.lt.s32.totalorder %s198, 1
      %s200 = scalar_select %p199, %s198, 1
      %s201 = smul.addr %s200, 8
      %s202 = scalar_lea.vmem %s1, %s201
      %s203 = sadd.s32 %s17, %s18
      %p204 = scmp.lt.s32.totalorder %s203, 1
      %s205 = scalar_select %p204, %s203, 1
      %p206 = scmp.lt.s32.totalorder %s17, 1
      %s207 = scalar_select %p206, %s17, 1
      %s208 = smul.addr %s207, 8
      %s209 = scalar_lea.vmem %s2, %s208
      %p210 = scmp.eq.s32.totalorder %s18, 0
      // Predicated region
      $region29: #{b_crossentropy.1} parent=27 // pred_check
        %p211 = pneg %p210
      $region30: #{b_crossentropy.1} parent=27 // pred_check_branch
        %213 = sbr.rel (%p211) target = $region32
      $region31: #{b_crossentropy.1} parent=27 // pred_region
        %214 = vst [vmem:[#allocation2] sm:$0xff] 0.0
      $region32: #{b_crossentropy.1} parent=27 // pred_fallthru
        _
      %v215 = vld [vmem:[%s192] sm:$0xff]
      %v216 = vld [vmem:[%s202] sm:$0xff]
      %v217 = vadd.f32 %v215, 0.0001
      %v218 = vlog2.pop %v217
      %v219 = vmul.f32 %v218, 0.6931472
      %v220 = vmul.f32 %v216, %v219
      %v221 = vsub.f32 1.0, %v216
      %v222 = vsub.f32 1.0, %v215
      %v223 = vadd.f32 %v222, 0.0001
      %v224 = vlog2.pop %v223
      %v225 = vmul.f32 %v224, 0.6931472
      %v226 = vmul.f32 %v221, %v225
      %v227 = vadd.f32 %v220, %v226
      %v228 = vld [vmem:[#allocation2] sm:$0xff]
      %v229 = vadd.f32 %v228, %v227
      %230 = vst [vmem:[#allocation2] sm:$0xff] %v229
      // Predicated region
      $region33: #{b_crossentropy.1} parent=27 // pred_check
        %p231 = pneg %p210
      $region34: #{b_crossentropy.1} parent=27 // pred_check_branch
        %233 = sbr.rel (%p231) target = $region36
      $region35: #{b_crossentropy.1} parent=27 // pred_region
        %v234 = vld [vmem:[#allocation2] sm:$0xff]
        %235 = vadd.xlane.f32.xlu0 %v234
        %v236 = vpop.xlane.xlu0 %235
        %v237 = vrot.slane %v236, 4
        %v238 = vadd.f32 %v236, %v237
        %v239 = vrot.slane %v238, 2
        %v240 = vadd.f32 %v238, %v239
        %v241 = vrot.slane %v240, 1
        %v242 = vadd.f32 %v240, %v241
        %s243 = vtos %v242
        %s244 = ssub.f32 0.0, %s243
        %s245 = smul.f32 %s244, 0.00048828125
        %v246 = vstv %s245
        %247 = vst [vmem:[%s209] sm:$0xff] %v246
      $region36: #{b_crossentropy.1} parent=27 // pred_fallthru
        _
      %p248 = scmp.lt.s32.totalorder %s17, 1
      %s249 = scalar_select %p248, %s17, 1
      %s250 = smul.addr %s249, 8
      %s251 = scalar_lea.vmem %s2, %s250
      // Predicated region
      $region37: #{b_crossentropy.1} parent=27 // pred_check
        %p252 = pneg %p107
      $region38: #{b_crossentropy.1} parent=27 // pred_check_branch
        %254 = sbr.rel (%p252) target = $region40
      $region39: #{b_crossentropy.1} parent=27 // pred_region
        _
      $region40: #{b_crossentropy.1} parent=27 // pred_fallthru
        _
    $region28: #{b_crossentropy.1} parent=5 // pred_fallthru
      _
    %p255 = scmp.le.s32.totalorder 2, %s8
    // Predicated region
    $region41: #{b_crossentropy.1} parent=5 // pred_check
      %p256 = pneg %p255
    $region42: #{b_crossentropy.1} parent=5 // pred_check_branch
      %258 = sbr.rel (%p256) target = $region44
    $region43: #{b_crossentropy.1} parent=5 // pred_region
      %s259 = ssub.s32 %s8, 2
      // Predicated region
      $region45: #{b_crossentropy.1} parent=43 // pred_check
        %p260 = pneg %p113
      $region46: #{b_crossentropy.1} parent=43 // pred_check_branch
        %262 = sbr.rel (%p260) target = $region48
      $region47: #{b_crossentropy.1} parent=43 // pred_region
        %p263 = scmp.lt.s32.totalorder %s19, 1
        %s264 = scalar_select %p263, %s19, 1
        %s265 = smul.addr %s264, 8
        %s266 = scalar_lea.vmem %s2, %s265
      $region48: #{b_crossentropy.1} parent=43 // pred_fallthru
        _
    $region44: #{b_crossentropy.1} parent=5 // pred_fallthru
      _
  $region6: #{b_crossentropy.1} parent=0 // loop_footer
    %s12 = sadd.s32 1, %s8
  $region7: #{b_crossentropy.1} parent=0 // loop_footer_branch
    %7 = sbr.rel target = $region3
  $region8: #{b_crossentropy.1} parent=0 // loop_exit
    _

</llo_original>
